<compile_context>
chip_gen: v5e
topology: v5e:2x2
jax: 0.10.0
libtpu: 0.0.40
codegen_flags: <defaults>
</compile_context>

<pallas_src>
import functools
import math

import jax
import jax.numpy as jnp
from jax.experimental import pallas as pl
from jax.experimental.pallas import tpu as pltpu

_LANE = 128
_DEF_MAX_TILE_M = 512
_DEF_MAX_TILE_N = 512
_DEF_MAX_TILE_K = 512
_DEF_MAX_UNTILED_K = 2048


def _round_up(x: int, m: int) -> int:
    return ((x + m - 1) // m) * m


def _lcm(a: int, b: int) -> int:
    return a * b // math.gcd(a, b)


def _pick_tile(total: int, unit: int, cap: int) -> int:
    """Largest multiple of `unit` that divides `total` and is <= cap (else `unit`)."""
    best = unit
    t = unit
    limit = min(total, cap)
    while t <= limit:
        if total % t == 0:
            best = t
        t += unit
    return best


# --------------------------------------------------------------------------
# Kernels
# --------------------------------------------------------------------------
def _dense_kernel(*refs, cast_to, has_bias):
    """K untiled: one MXU dot per (i, j) output tile, bias fused, no scratch."""
    if has_bias:
        x_ref, w_ref, b_ref, o_ref = refs
    else:
        x_ref, w_ref, o_ref = refs
        b_ref = None
    a = x_ref[...]
    if cast_to is not None:
        a = a.astype(cast_to)          # in-kernel cast: bf16 MXU, no wrapper copy
    acc = jnp.dot(a, w_ref[...], preferred_element_type=jnp.float32)
    if b_ref is not None:
        acc = acc + b_ref[...]         # single VPU add (bias pre-tiled, f32)
    o_ref[...] = acc.astype(o_ref.dtype)


def _dense_kernel_ktiled(*refs, cast_to, has_bias, acc_in_out):
    """K tiled: reduction axis last; bias folded into the k==0 init."""
    if has_bias:
        x_ref, w_ref, b_ref, *rest = refs
    else:
        x_ref, w_ref, *rest = refs
        b_ref = None
    o_ref = rest[0]
    acc_ref = o_ref if acc_in_out else rest[1]

    k = pl.program_id(2)

    @pl.when(k == 0)
    def _init():
        if b_ref is not None:
            acc_ref[...] = b_ref[...].astype(acc_ref.dtype)
        else:
            acc_ref[...] = jnp.zeros_like(acc_ref)

    a = x_ref[...]
    if cast_to is not None:
        a = a.astype(cast_to)
    acc_ref[...] += jnp.dot(a, w_ref[...], preferred_element_type=jnp.float32)

    if not acc_in_out:
        @pl.when(k == pl.num_programs(2) - 1)
        def _finalize():
            o_ref[...] = acc_ref[...].astype(o_ref.dtype)


# --------------------------------------------------------------------------
# Weight-side preparation (call once, reuse across forward calls)
# --------------------------------------------------------------------------
def prepare_dense_params(weight, bias=None, *, compute_dtype=jnp.bfloat16,
                         weight_is_transposed=False,
                         max_untiled_k=_DEF_MAX_UNTILED_K,
                         max_tile_n=_DEF_MAX_TILE_N,
                         max_tile_k=_DEF_MAX_TILE_K):
    """One-time preprocessing of (weight, bias); amortized across forward calls.

    weight: (out_features, in_features), or (in_features, out_features) when
            weight_is_transposed=True.
    bias:   (map_units, out_features) or None.
    compute_dtype: MXU input dtype (default bf16; f32 accumulation is always
            kept).  Pass None to compute in the weights' own dtype.
    """
    if weight_is_transposed:
        in_features, out_features = weight.shape
        wT = weight
    else:
        out_features, in_features = weight.shape
        wT = weight.T

    Np = _round_up(out_features, _LANE)
    tn = _pick_tile(Np, _LANE, max_tile_n)

    k_tiled = in_features > max_untiled_k
    if k_tiled:
        Kp = _round_up(in_features, _LANE)
        tk = _pick_tile(Kp, _LANE, max_tile_k)
    else:
        Kp = in_features            # keep K unpadded: single dot, no K grid axis
        tk = None

    pad_k, pad_n = Kp - in_features, Np - out_features
    if pad_k or pad_n:
        wT = jnp.pad(wT, ((0, pad_k), (0, pad_n)))
    if compute_dtype is not None and wT.dtype != jnp.dtype(compute_dtype):
        wT = wT.astype(compute_dtype)

    bias_p = None
    if bias is not None:
        map_units = bias.shape[0]
        assert bias.shape == (map_units, out_features)
        bias_p = bias.astype(jnp.float32)
        if pad_n:
            bias_p = jnp.pad(bias_p, ((0, 0), (0, pad_n)))

    return dict(wT=wT, bias=bias_p,
                in_features=in_features, out_features=out_features,
                Kp=Kp, Np=Np, tk=tk, tn=tn, compute_dtype=compute_dtype)


# --------------------------------------------------------------------------
# Forward
# --------------------------------------------------------------------------
def dense_forward(x, params, *, out_dtype=None, max_tile_m=_DEF_MAX_TILE_M):
    """Pallas equivalent of Dense.forward using prepared params.

    x: (batch, map_units, in_features) or (map_units, in_features).
    """
    K = params["in_features"]
    N = params["out_features"]
    Kp, Np = params["Kp"], params["Np"]
    tk, tn = params["tk"], params["tn"]
    wT = params["wT"]
    bias_p = params["bias"]
    compute_dtype = params["compute_dtype"]
    has_bias = bias_p is not None

    is_batched = x.ndim == 3
    if not is_batched:
        x = x[None]
    batch, map_units, k_in = x.shape
    assert k_in == K
    if has_bias:
        assert bias_p.shape[0] == map_units

    if out_dtype is None:
        out_dtype = x.dtype
    bm = batch * map_units
    x2d = x.reshape(bm, K)                         # metadata-only reshape

    cast_to = None
    if compute_dtype is not None and x2d.dtype != jnp.dtype(compute_dtype):
        cast_to = jnp.dtype(compute_dtype)         # cast in-kernel (no HBM copy of x)

    # ------------------------ M tile selection ------------------------
    sub = 16 if ((cast_to is not None and cast_to.itemsize == 2)
                 or x2d.dtype.itemsize == 2) else 8
    base = _lcm(sub, map_units)
    if bm <= max_tile_m:
        tm, Mp = bm, bm                            # single full-dim M tile, no pad
    elif bm % base == 0:
        tm, Mp = _pick_tile(bm, base, max_tile_m), bm
    else:
        # TODO(synk): rare fallback — pads M (one activation copy per call).
        tm = max(base, (max_tile_m // base) * base)
        Mp = _round_up(bm, tm)

    k_tiled = tk is not None
    if k_tiled and Kp != K:
        x2d = jnp.pad(x2d, ((0, 0), (0, Kp - K)))  # zeros: padded K adds nothing
    if Mp != bm:
        x2d = jnp.pad(x2d, ((0, Mp - bm), (0, 0)))

    m_tiles, n_tiles = Mp // tm, Np // tn

    # v7x has two TensorCores: if a non-tiny problem collapses to a single
    # output tile, split N so the "parallel" grid axes expose >= 2 tiles.
    if m_tiles * n_tiles == 1 and Np >= 2 * _LANE and bm * Np * Kp >= (1 << 24):
        tn = _pick_tile(Np, _LANE, Np // 2)
        n_tiles = Np // tn

    # Bias pre-broadcast to (tm, Np) f32: kernel does a plain add / acc init.
    if has_bias:
        bias_tiled = jnp.tile(bias_p, (tm // map_units, 1))

    k_block = tk if k_tiled else Kp
    acc_in_out = k_tiled and jnp.dtype(out_dtype) == jnp.float32

    # ---- derive the VMEM budget from the actual tiles (v7x has 64 MiB) ----
    needed = 2 * (tm * k_block * x2d.dtype.itemsize
                  + k_block * tn * wT.dtype.itemsize
                  + tm * tn * jnp.dtype(out_dtype).itemsize)
    if has_bias:
        needed += 2 * tm * tn * 4
    if k_tiled and not acc_in_out:
        needed += tm * tn * 4
    vmem_limit = int(min(48 * 2**20, max(32 * 2**20, needed + 8 * 2**20)))

    if k_tiled:
        grid = (m_tiles, n_tiles, Kp // tk)
        in_specs = [pl.BlockSpec((tm, tk), lambda i, j, k: (i, k)),
                    pl.BlockSpec((tk, tn), lambda i, j, k: (k, j))]
        if has_bias:
            in_specs.append(pl.BlockSpec((tm, tn), lambda i, j, k: (0, j)))
        out_spec = pl.BlockSpec((tm, tn), lambda i, j, k: (i, j))
        scratch = [] if acc_in_out else [pltpu.VMEM((tm, tn), jnp.float32)]
        kernel = functools.partial(_dense_kernel_ktiled, cast_to=cast_to,
                                   has_bias=has_bias, acc_in_out=acc_in_out)
        semantics = ("parallel", "parallel", "arbitrary")
    else:
        grid = (m_tiles, n_tiles)
        in_specs = [pl.BlockSpec((tm, Kp), lambda i, j: (i, 0)),
                    pl.BlockSpec((Kp, tn), lambda i, j: (0, j))]
        if has_bias:
            in_specs.append(pl.BlockSpec((tm, tn), lambda i, j: (0, j)))
        out_spec = pl.BlockSpec((tm, tn), lambda i, j: (i, j))
        scratch = []
        kernel = functools.partial(_dense_kernel, cast_to=cast_to,
                                   has_bias=has_bias)
        semantics = ("parallel", "parallel")

    operands = [x2d, wT] + ([bias_tiled] if has_bias else [])

    y2d = pl.pallas_call(
        kernel,
        out_shape=jax.ShapeDtypeStruct((Mp, Np), out_dtype),
        grid_spec=pltpu.PrefetchScalarGridSpec(
            num_scalar_prefetch=0,
            grid=grid,
            in_specs=in_specs,
            out_specs=out_spec,
            scratch_shapes=scratch,
        ),
        compiler_params=pltpu.CompilerParams(
            dimension_semantics=semantics,
            vmem_limit_bytes=vmem_limit,
        ),
    )(*operands)

    if Mp != bm or Np != N:
        y2d = y2d[:bm, :N]
    y = y2d.reshape(batch, map_units, N)
    if not is_batched:
        y = y[0]
    return y


def dense(x, weight, bias=None, **prepare_kwargs):
    """One-shot convenience wrapper (prefer prepare_dense_params + dense_forward
    so the weight-side preprocessing is amortized across calls)."""
    return dense_forward(x, prepare_dense_params(weight, bias, **prepare_kwargs))


# --------------------------------------------------------------------------
# Demo / self-test
# --------------------------------------------------------------------------
if __name__ == "__main__":
    batch, map_units, in_features, out_features = 2, 8, 32, 16

    key = jax.random.PRNGKey(0)
    kx, kw, kb, kx2, kw2, kb2, kx7 = jax.random.split(key, 7)

    x = jax.random.normal(kx, (batch, map_units, in_features), dtype=jnp.float32)
    weight = jax.random.normal(kw, (out_features, in_features), dtype=jnp.float32)
    bias = 0.1 * jax.random.normal(kb, (map_units, out_features), dtype=jnp.float32)

    hi = jax.lax.Precision.HIGHEST
    y_ref = jnp.einsum("bmi,oi->bmo", x, weight, precision=hi) + bias[None]

    # ---- exact-f32 path (compute_dtype=None), tiny single-tile grid ----
    params_f32 = prepare_dense_params(weight, bias, compute_dtype=None)
    y = jax.block_until_ready(dense_forward(x, params_f32))
    assert y.shape == (batch, map_units, out_features)
    assert jnp.allclose(y, y_ref, atol=1e-4, rtol=1e-4)

    # ---- default path: bf16 MXU compute with f32 accumulation ----
    params_bf16 = prepare_dense_params(weight, bias)
    y_bf = jax.block_until_ready(dense_forward(x, params_bf16))
    xq = x.astype(jnp.bfloat16).astype(jnp.float32)
    wq = weight.astype(jnp.bfloat16).astype(jnp.float32)
    y_ref_bf = jnp.einsum("bmi,oi->bmo", xq, wq, precision=hi) + bias[None]
    assert jnp.allclose(y_bf, y_ref_bf, atol=2e-2, rtol=2e-2)

    # ---- non-batched (map_units, in_features) input ----
    y_nb = jax.block_until_ready(dense_forward(x[0], params_f32))
    assert jnp.allclose(y_nb, y_ref[0], atol=1e-4, rtol=1e-4)

    # ---- bias=None specialization (no bias operand streamed) ----
    params_nob = prepare_dense_params(weight, None, compute_dtype=None)
    y_nob = jax.block_until_ready(dense_forward(x, params_nob))
    assert jnp.allclose(y_nob,
                        jnp.einsum("bmi,oi->bmo", x, weight, precision=hi),
                        atol=1e-4, rtol=1e-4)

    # ---- multiple M tiles (pre-tiled bias replicated across row tiles) ----
    x7 = jax.random.normal(kx7, (4, map_units, in_features), dtype=jnp.float32)
    y7 = jax.block_until_ready(dense_forward(x7, params_f32, max_tile_m=16))
    y7_ref = jnp.einsum("bmi,oi->bmo", x7, weight, precision=hi) + bias[None]
    assert jnp.allclose(y7, y7_ref, atol=1e-4, rtol=1e-4)

    # ---- K-tiled reduction grid (forced small K tile); f32 output
    #      accumulates directly into the output block (no scratch) ----
    in2, out2, batch2 = 512, 384, 3
    x2 = jax.random.normal(kx2, (batch2, map_units, in2), dtype=jnp.float32)
    weight2 = jax.random.normal(kw2, (out2, in2), dtype=jnp.float32)
    bias2 = 0.1 * jax.random.normal(kb2, (map_units, out2), dtype=jnp.float32)
    y2_ref = jnp.einsum("bmi,oi->bmo", x2, weight2, precision=hi) + bias2[None]

    params2_f32 = prepare_dense_params(weight2, bias2, compute_dtype=None,
                                       max_untiled_k=128, max_tile_k=128)
    y2 = jax.block_until_ready(dense_forward(x2, params2_f32))
    assert jnp.allclose(y2, y2_ref, atol=1e-2, rtol=1e-2)

    # ---- K-tiled grid with bf16 output -> f32 VMEM scratch accumulator ----
    params2_bf16 = prepare_dense_params(weight2, bias2,
                                        max_untiled_k=128, max_tile_k=128)
    y2_bf = jax.block_until_ready(
        dense_forward(x2.astype(jnp.bfloat16), params2_bf16))
    xq2 = x2.astype(jnp.bfloat16).astype(jnp.float32)
    wq2 = weight2.astype(jnp.bfloat16).astype(jnp.float32)
    y2_ref_bf = jnp.einsum("bmi,oi->bmo", xq2, wq2, precision=hi) + bias2[None]
    assert jnp.allclose(y2_bf.astype(jnp.float32), y2_ref_bf, atol=0.5, rtol=2e-2)

    print("KERNEL_OK")
</pallas_src>

<mosaic_0001>
module attributes {stable_mosaic.version = 11 : i64} {
  func.func @_dense_kernel(%arg0: i32, %arg1: i32, %arg2: memref<16x32xf32, #tpu.memory_space<vmem>>, %arg3: memref<32x128xf32, #tpu.memory_space<vmem>>, %arg4: memref<16x128xf32, #tpu.memory_space<vmem>>, %arg5: memref<16x128xf32, #tpu.memory_space<vmem>>) attributes {dimension_semantics = [#tpu.dimension_semantics<parallel>, #tpu.dimension_semantics<parallel>], iteration_bounds = array<i64: 1, 1>, scalar_prefetch = 0 : i64, scratch_operands = 0 : i64, tpu.core_type = #tpu.core_type<tc>, window_params = [{transform_indices = @transform_0, window_bounds = array<i64: 16, 32>}, {transform_indices = @transform_1, window_bounds = array<i64: 32, 128>}, {transform_indices = @transform_2, window_bounds = array<i64: 16, 128>}, {transform_indices = @transform_3, window_bounds = array<i64: 16, 128>}]} {
    %c0 = arith.constant 0 : index
    %c0_0 = arith.constant 0 : index
    %0 = vector.load %arg2[%c0, %c0_0] : memref<16x32xf32, #tpu.memory_space<vmem>>, vector<16x32xf32>
    %c0_1 = arith.constant 0 : index
    %c0_2 = arith.constant 0 : index
    %1 = vector.load %arg3[%c0_1, %c0_2] : memref<32x128xf32, #tpu.memory_space<vmem>>, vector<32x128xf32>
    %cst = arith.constant dense<0.000000e+00> : vector<16x128xf32>
    %2 = tpu.matmul %0, %1, %cst {dimension_numbers = #tpu.dot_dimension_numbers<[1], [0], [0], [1], [0, 0, 1, 1], [], []>} : vector<16x32xf32>, vector<32x128xf32>, vector<16x128xf32> -> vector<16x128xf32>
    %c0_3 = arith.constant 0 : index
    %c0_4 = arith.constant 0 : index
    %3 = vector.load %arg4[%c0_3, %c0_4] : memref<16x128xf32, #tpu.memory_space<vmem>>, vector<16x128xf32>
    %4 = arith.addf %2, %3 : vector<16x128xf32>
    %c0_5 = arith.constant 0 : index
    %c0_6 = arith.constant 0 : index
    %5 = vector.load %arg5[%c0_5, %c0_6] : memref<16x128xf32, #tpu.memory_space<vmem>>, vector<16x128xf32>
    tpu.vector_store %arg5[%c0_5, %c0_6], %4 {strides = array<i32>} : memref<16x128xf32, #tpu.memory_space<vmem>>, vector<16x128xf32>,
    return
  }
  func.func @transform_0(%arg0: i32, %arg1: i32) -> (i32, i32) {
    %c0_i32 = arith.constant 0 : i32
    %c0_i32_0 = arith.constant 0 : i32
    return %arg0, %c0_i32 : i32, i32
  }
  func.func @transform_1(%arg0: i32, %arg1: i32) -> (i32, i32) {
    %c0_i32 = arith.constant 0 : i32
    %c0_i32_0 = arith.constant 0 : i32
    return %c0_i32, %arg1 : i32, i32
  }
  func.func @transform_2(%arg0: i32, %arg1: i32) -> (i32, i32) {
    %c0_i32 = arith.constant 0 : i32
    %c0_i32_0 = arith.constant 0 : i32
    return %c0_i32, %arg1 : i32, i32
  }
  func.func @transform_3(%arg0: i32, %arg1: i32) -> (i32, i32) {
    %c0_i32 = arith.constant 0 : i32
    return %arg0, %arg1 : i32, i32
  }
}

</mosaic_0001>

<llo_original>
// kernel: tpu_custom_call.1
$region0: #{tpu_custom_call.1}
  #allocation0 [shape = 'u32[]', space=smem, size = 0x4, offset = 0x4, fixed_abs, tag = 'smem constant byte address 0x4 - core index']
  #allocation1 [shape = 'u32[72,128]{1,0:T(1,128)}', space=vmem, size = 0x9000, scoped, tag = 'internal scratch']
  %s0 = inlined_call_operand.hbm [shape: f32[16,32], index: 0, kind: input, shape index: {}]
  %s1 = inlined_call_operand.hbm [shape: f32[32,128], index: 1, kind: input, shape index: {}]
  %s2 = inlined_call_operand.hbm [shape: f32[16,128], index: 2, kind: input, shape index: {}]
  %s3 = inlined_call_operand.hbm [shape: f32[16,128], index: 3, kind: output, shape index: {}]
  %s4 = sld [smem:[#allocation0]]
  $region34: #{tpu_custom_call.1} parent=0
    _
  %s6 = ssub.s32 1, %s4
  %s7 = scalar_select 0, %s6, %s4
  $region1: #{tpu_custom_call.1} parent=0
    #allocation2 [shape = 'u8[8192]{0}', space=vmem, size = 0x2000, scoped, tag = 'input window, operand 0, single buffered']
    #allocation3 [shape = 's32[1]{0}', space=sflag, size = 0x4, scoped, tag = 'scoped memory for tpu_custom_call.1']
    #allocation4 [shape = 's32[1]{0}', space=sflag, size = 0x4, scoped, tag = 'scoped memory for tpu_custom_call.1']
    #allocation5 [shape = 'u8[16384]{0}', space=vmem, size = 0x4000, scoped, tag = 'input window, operand 1, single buffered']
    #allocation6 [shape = 's32[1]{0}', space=sflag, size = 0x4, scoped, tag = 'scoped memory for tpu_custom_call.1']
    #allocation7 [shape = 'u8[8192]{0}', space=vmem, size = 0x2000, scoped, tag = 'input window, operand 2, single buffered']
    #allocation8 [shape = 'u8[8192]{0}', space=vmem, size = 0x2000, scoped, tag = 'output window, operand 0, single buffered']
    %8 = vsyncpa [#allocation3], 0
    %9 = vsyncpa [#allocation6], 0
    %10 = vsyncpa [#allocation4], 0
    // Predicated region
    $region2: #{tpu_custom_call.1} parent=1 // pred_check
      _
    $region3: #{tpu_custom_call.1} parent=1 // pred_check_branch
      %12 = sbr.rel (0) target = $region5
    $region4: #{tpu_custom_call.1} parent=1 // pred_region
      %14 = vsyncadd [#allocation3], 0
      %s15 = sshll.u32 %s0, 4
      %s16 = int_to_ptr.hbm [resolvable:$true] %s15
      %s17 = sshll.u32 [#allocation2], 4
      %s18 = int_to_ptr.vmem [resolvable:$true] %s17
      %23 = dma.hbm_to_vmem [thread:$0]  %s16, 256, %s18, [#allocation3], 128, 128, 8
    $region5: #{tpu_custom_call.1} parent=1 // pred_fallthru
      _
    // Predicated region
    $region6: #{tpu_custom_call.1} parent=1 // pred_check
      _
    $region7: #{tpu_custom_call.1} parent=1 // pred_check_branch
      %25 = sbr.rel (0) target = $region9
    $region8: #{tpu_custom_call.1} parent=1 // pred_region
      %27 = vsyncadd [#allocation6], 0
      %s28 = sshll.u32 %s1, 4
      %s29 = int_to_ptr.hbm [resolvable:$true] %s28
      %s30 = sshll.u32 [#allocation5], 4
      %s31 = int_to_ptr.vmem [resolvable:$true] %s30
      %36 = dma.hbm_to_vmem [thread:$0]  %s29, 512, %s31, [#allocation6], 128, 128, 8
    $region9: #{tpu_custom_call.1} parent=1 // pred_fallthru
      _
    // Predicated region
    $region10: #{tpu_custom_call.1} parent=1 // pred_check
      _
    $region11: #{tpu_custom_call.1} parent=1 // pred_check_branch
      %38 = sbr.rel (0) target = $region13
    $region12: #{tpu_custom_call.1} parent=1 // pred_region
      %40 = vsyncadd [#allocation6], 0
      %s41 = sshll.u32 %s2, 4
      %s42 = int_to_ptr.hbm [resolvable:$true] %s41
      %s43 = sshll.u32 [#allocation7], 4
      %s44 = int_to_ptr.vmem [resolvable:$true] %s43
      %49 = dma.hbm_to_vmem [thread:$0]  %s42, 256, %s44, [#allocation6], 128, 128, 8
    $region13: #{tpu_custom_call.1} parent=1 // pred_fallthru
      _
    // Predicated region
    $region14: #{tpu_custom_call.1} parent=1 // pred_check
      _
    $region15: #{tpu_custom_call.1} parent=1 // pred_check_branch
      %51 = sbr.rel (0) target = $region17
    $region16: #{tpu_custom_call.1} parent=1 // pred_region
      %53 = dma.done [#allocation3], 256
    $region17: #{tpu_custom_call.1} parent=1 // pred_fallthru
      _
    // Predicated region
    $region18: #{tpu_custom_call.1} parent=1 // pred_check
      _
    $region19: #{tpu_custom_call.1} parent=1 // pred_check_branch
      %55 = sbr.rel (0) target = $region21
    $region20: #{tpu_custom_call.1} parent=1 // pred_region
      %57 = dma.done [#allocation6], 512
    $region21: #{tpu_custom_call.1} parent=1 // pred_fallthru
      _
    // Predicated region
    $region22: #{tpu_custom_call.1} parent=1 // pred_check
      _
    $region23: #{tpu_custom_call.1} parent=1 // pred_check_branch
      %59 = sbr.rel (0) target = $region25
    $region24: #{tpu_custom_call.1} parent=1 // pred_region
      %61 = dma.done [#allocation6], 256
    $region25: #{tpu_custom_call.1} parent=1 // pred_fallthru
      _
    %v62 = vld [vmem:[#allocation2] sm:$0xff]
    %v63 = vld [vmem:[#allocation2 + $0x8] sm:$0xff]
    %v64 = vld [vmem:[#allocation5] sm:$0xff]
    %v65 = vld [vmem:[#allocation5 + $0x8] sm:$0xff]
    %v66 = vld [vmem:[#allocation5 + $0x10] sm:$0xff]
    %v67 = vld [vmem:[#allocation5 + $0x18] sm:$0xff]
    %v68 = vld [vmem:[#allocation7] sm:$0xff]
    %v69 = vld [vmem:[#allocation7 + $0x8] sm:$0xff]
    %vm70 = vcmask 261120
    %v72 = vsel %vm70, %v62, 0
    %v75 = vsel %vm70, %v63, 0
    %77 = vmatpush.msra.mxu0 0.0
    %78 = vmatpush.msra.mxu0 0.0
    %79 = vmatpush.msra.mxu0 0.0
    %80 = vmatpush.msra.mxu0 0.0
    %81 = vmatpush.msra.mxu0 0.0
    %82 = vmatpush.msra.mxu0 0.0
    %83 = vmatpush.msra.mxu0 0.0
    %84 = vmatpush.msra.mxu0 0.0
    %85 = vmatpush.msra.mxu0 0.0
    %86 = vmatpush.msra.mxu0 0.0
    %87 = vmatpush.msra.mxu0 0.0
    %88 = vmatpush.msra.mxu0 0.0
    %89 = vmatpush.msra.mxu0 %v67
    %90 = vmatpush.msra.mxu0 %v66
    %91 = vmatpush.msra.mxu0 %v65
    %92 = vmatpush.msra.mxu0 %v64
    %93 = vmatmul.f32.gmra.mxu0 %v72
    %v94 = vpop.f32.mrf.mxu0
    %v95 = vadd.f32 %v68, %v94
    %96 = vmatmul.f32.gmra.mxu0 %v75
    %v97 = vpop.f32.mrf.mxu0
    %v98 = vadd.f32 %v69, %v97
    %99 = vdwg.mxu0
    %100 = vst [vmem:[#allocation8] sm:$0xff] %v95
    %101 = vst [vmem:[#allocation8 + $0x8] sm:$0xff] %v98
    // Predicated region
    $region26: #{tpu_custom_call.1} parent=1 // pred_check
      _
    $region27: #{tpu_custom_call.1} parent=1 // pred_check_branch
      %103 = sbr.rel (0) target = $region29
    $region28: #{tpu_custom_call.1} parent=1 // pred_region
      %105 = vsyncadd [#allocation4], 0
      %s106 = sshll.u32 [#allocation8], 4
      %s107 = int_to_ptr.vmem [resolvable:$true] %s106
      %s108 = sshll.u32 %s3, 4
      %s109 = int_to_ptr.hbm [resolvable:$true] %s108
      %114 = dma.vmem_to_hbm [thread:$0]  %s107, 256, %s109, [#allocation4], 128, 128, 8
    $region29: #{tpu_custom_call.1} parent=1 // pred_fallthru
      _
    // Predicated region
    $region30: #{tpu_custom_call.1} parent=1 // pred_check
      _
    $region31: #{tpu_custom_call.1} parent=1 // pred_check_branch
      %116 = sbr.rel (0) target = $region33
    $region32: #{tpu_custom_call.1} parent=1 // pred_region
      %118 = dma.done [#allocation4], 256
    $region33: #{tpu_custom_call.1} parent=1 // pred_fallthru
      _
    %119 = vsyncpa [#allocation3], 1
    %120 = vsyncpa [#allocation6], 1
    %121 = vsyncpa [#allocation4], 1

</llo_original>
